<compile_context>
chip_gen: v6e
topology: v6e:2x2x1
jax: 0.10.0
libtpu: 0.0.40
codegen_flags: <defaults>
</compile_context>

<pallas_src>
import jax
import jax.numpy as jnp
from jax.experimental import pallas as pl
from jax.experimental.pallas import tpu as pltpu

_LANE = 128
_SUBLANE = 8


def _round_up(n, m):
    return ((n + m - 1) // m) * m


def mlp_kernel(x_ref, w1_ref, b1_ref, w2_ref, b2_ref, o_ref):
    # fc1: cast the streamed f32 activations to bf16 in-register (no separate
    # XLA cast pass), bf16 x bf16 matmul with f32 accumulation on the MXU.
    x = x_ref[...].astype(jnp.bfloat16)
    h = jnp.dot(x, w1_ref[...], preferred_element_type=jnp.float32)
    h = h + b1_ref[...]
    # Sigmoid epilogue in f32 (v5e's VPU/EUP have no bf16 path).  Exact
    # reciprocal is essentially free here: the EUP slot is far from saturated
    # and the MXU is the binding unit.
    h = pl.reciprocal(1.0 + jnp.exp(-h), approx=False)
    # fc2 on the MXU with lane-padded (Cp = 128) columns; only the real C
    # columns are stored (tiny masked store; the store slot is not binding).
    out = jnp.dot(h.astype(jnp.bfloat16), w2_ref[...],
                  preferred_element_type=jnp.float32)
    c = o_ref.shape[-1]
    o_ref[...] = (out[:, :c] + b2_ref[...]).astype(o_ref.dtype)


def prepare_mlp_params(w1, b1, w2, b2):
    """One-time (init) weight prep: pad H/C to lane multiples, cast to bf16.

    w1: [D, H] (transposed from PyTorch nn.Linear's [H, D]), b1: [H],
    w2: [H, C], b2: [C].  Padded H columns of w1/b1 produce sigmoid(0)=0.5 but
    hit zero rows of the padded w2, so fc2 is unaffected.
    """
    D, H = w1.shape
    C = w2.shape[1]
    Hp = _round_up(H, _LANE)
    Cp = _round_up(C, _LANE)
    return {
        "w1": jnp.pad(w1, ((0, 0), (0, Hp - H))).astype(jnp.bfloat16),
        "b1": jnp.pad(b1.astype(jnp.float32).reshape(1, H), ((0, 0), (0, Hp - H))),
        "w2": jnp.pad(w2, ((0, Hp - H), (0, Cp - C))).astype(jnp.bfloat16),
        "b2": b2.astype(jnp.float32).reshape(1, C),
        "D": D, "H": H, "C": C, "Hp": Hp, "Cp": Cp,
    }


def mlp_forward(x, params, *, tb=512, vmem_limit_bytes=None):
    """x: [B, D] float -> [B, C] f32.  `params` from prepare_mlp_params."""
    B, D = x.shape
    w1p, b1p, w2p, b2p = params["w1"], params["b1"], params["w2"], params["b2"]
    Hp, Cp, C = params["Hp"], params["Cp"], params["C"]
    assert params["D"] == D, "input feature dim mismatch with prepared params"

    # Batch tile: multiple of 8, no larger than the (rounded-up) batch.
    tb = int(max(_SUBLANE, _round_up(min(tb, B), _SUBLANE)))
    n_steps = int(pl.cdiv(B, tb))

    # Megacore split only when each core gets >= 2 pipelined steps; otherwise
    # (small batch) keep the grid on one core so the resident weights are
    # DMA'd once instead of once per TensorCore.
    dims = ("parallel",) if n_steps >= 4 else ("arbitrary",)

    itemsize = x.dtype.itemsize
    weight_bytes = (w1p.size * w1p.dtype.itemsize
                    + w2p.size * w2p.dtype.itemsize
                    + b1p.size * b1p.dtype.itemsize
                    + b2p.size * b2p.dtype.itemsize)

    if vmem_limit_bytes is None:
        # Double-buffered streams + (double-buffered) resident weights +
        # compute scratch, plus ~25% + 4 MiB headroom.  Min 32 MiB (v5e's
        # default scoped limit is 16 MiB), max 56 MiB (v7x has 64 MiB/core).
        stream_bytes = tb * D * itemsize + tb * C * 4
        scratch_bytes = tb * (2 * D + 6 * Hp + 4 * Cp)
        footprint = 2 * (weight_bytes + stream_bytes) + scratch_bytes
        vmem_limit_bytes = int(min(max(footprint + footprint // 4 + (4 << 20),
                                       32 << 20), 56 << 20))

    cost = pl.CostEstimate(
        flops=2 * B * D * Hp + 2 * B * Hp * Cp,
        transcendentals=B * Hp,
        bytes_accessed=B * D * itemsize + weight_bytes + B * C * 4,
    )

    return pl.pallas_call(
        mlp_kernel,
        out_shape=jax.ShapeDtypeStruct((B, C), jnp.float32),
        grid_spec=pltpu.PrefetchScalarGridSpec(
            num_scalar_prefetch=0,
            grid=(n_steps,),
            in_specs=[
                pl.BlockSpec((tb, D), lambda i: (i, 0)),    # x tile (streamed f32)
                pl.BlockSpec((D, Hp), lambda i: (0, 0)),    # fc1 weight (resident)
                pl.BlockSpec((1, Hp), lambda i: (0, 0)),    # fc1 bias
                pl.BlockSpec((Hp, Cp), lambda i: (0, 0)),   # fc2 weight (resident)
                pl.BlockSpec((1, C), lambda i: (0, 0)),     # fc2 bias (unpadded)
            ],
            out_specs=pl.BlockSpec((tb, C), lambda i: (i, 0)),  # direct (B, C) store
        ),
        compiler_params=pltpu.CompilerParams(
            dimension_semantics=dims,
            vmem_limit_bytes=vmem_limit_bytes,
        ),
        cost_estimate=cost,
    )(x, w1p, b1p, w2p, b2p)


if __name__ == "__main__":
    # Small shapes consistent with the module (Linear -> Sigmoid -> Linear).
    # Real module sizes are input=2348, hidden=1000, classes=1; shrunk here but
    # deliberately non-multiples of 128 to exercise the H/C padding path.
    batch = 128
    input_size = 300
    hidden_size = 200
    num_classes = 1

    key = jax.random.PRNGKey(0)
    kx, kw1, kw2 = jax.random.split(key, 3)

    x = jax.random.normal(kx, (batch, input_size), dtype=jnp.float32)

    # init_weights(): weights ~ U(-0.1, 0.1), biases = 0.
    w1 = jax.random.uniform(kw1, (input_size, hidden_size),
                            minval=-0.1, maxval=0.1, dtype=jnp.float32)
    b1 = jnp.zeros((hidden_size,), dtype=jnp.float32)
    w2 = jax.random.uniform(kw2, (hidden_size, num_classes),
                            minval=-0.1, maxval=0.1, dtype=jnp.float32)
    b2 = jnp.zeros((num_classes,), dtype=jnp.float32)

    # One-time weight prep (pad/cast) -- done at init, not per forward call.
    params = prepare_mlp_params(w1, b1, w2, b2)

    # tb=64 -> grid=(2,) even at this small batch so x/out DMA pipelines
    # against compute.  (Production default is tb=512.)
    out = mlp_forward(x, params, tb=64)
    out = jax.block_until_ready(out)

    # Reference in plain JAX (f32).  bf16 matmul operands in the kernel ->
    # modest tolerance (exact-reciprocal sigmoid tightened it vs. before).
    ref = jnp.dot(jax.nn.sigmoid(x @ w1 + b1[None, :]), w2) + b2[None, :]
    assert out.shape == (batch, num_classes)
    err = float(jnp.max(jnp.abs(out - ref)))
    assert jnp.allclose(out, ref, atol=1e-2, rtol=1e-2), err

    print("KERNEL_OK")
</pallas_src>

<mosaic_0001>
module attributes {stable_mosaic.version = 11 : i64} {
  func.func @mlp_kernel(%arg0: i32, %arg1: memref<64x300xf32, #tpu.memory_space<vmem>>, %arg2: memref<300x256xbf16, #tpu.memory_space<vmem>>, %arg3: memref<1x256xf32, #tpu.memory_space<vmem>>, %arg4: memref<256x128xbf16, #tpu.memory_space<vmem>>, %arg5: memref<1x1xf32, #tpu.memory_space<vmem>>, %arg6: memref<64x1xf32, #tpu.memory_space<vmem>>) attributes {dimension_semantics = [#tpu.dimension_semantics<arbitrary>], iteration_bounds = array<i64: 2>, scalar_prefetch = 0 : i64, scratch_operands = 0 : i64, tpu.core_type = #tpu.core_type<tc>, window_params = [{transform_indices = @transform_0, window_bounds = array<i64: 64, 300>}, {pipeline_mode = #tpu.pipeline_mode<synchronous>, transform_indices = @transform_1, window_bounds = array<i64: 300, 256>}, {pipeline_mode = #tpu.pipeline_mode<synchronous>, transform_indices = @transform_2, window_bounds = array<i64: 1, 256>}, {pipeline_mode = #tpu.pipeline_mode<synchronous>, transform_indices = @transform_3, window_bounds = array<i64: 256, 128>}, {pipeline_mode = #tpu.pipeline_mode<synchronous>, transform_indices = @transform_4, window_bounds = array<i64: 1, 1>}, {transform_indices = @transform_5, window_bounds = array<i64: 64, 1>}]} {
    %c0 = arith.constant 0 : index
    %c0_0 = arith.constant 0 : index
    %0 = vector.load %arg1[%c0, %c0_0] : memref<64x300xf32, #tpu.memory_space<vmem>>, vector<64x300xf32>
    %1 = arith.truncf %0 : vector<64x300xf32> to vector<64x300xbf16>
    %c0_1 = arith.constant 0 : index
    %c0_2 = arith.constant 0 : index
    %2 = vector.load %arg2[%c0_1, %c0_2] : memref<300x256xbf16, #tpu.memory_space<vmem>>, vector<300x256xbf16>
    %cst = arith.constant dense<0.000000e+00> : vector<64x256xf32>
    %3 = tpu.matmul %1, %2, %cst {dimension_numbers = #tpu.dot_dimension_numbers<[1], [0], [0], [1], [0, 0, 1, 1], [], []>} : vector<64x300xbf16>, vector<300x256xbf16>, vector<64x256xf32> -> vector<64x256xf32>
    %c0_3 = arith.constant 0 : index
    %c0_4 = arith.constant 0 : index
    %4 = vector.load %arg3[%c0_3, %c0_4] : memref<1x256xf32, #tpu.memory_space<vmem>>, vector<1x256xf32>
    %5 = vector.broadcast %4 : vector<1x256xf32> to vector<64x256xf32>
    %6 = arith.addf %3, %5 : vector<64x256xf32>
    %cst_5 = arith.constant 0.000000e+00 : f32
    %7 = vector.broadcast %cst_5 : f32 to vector<64x256xf32>
    %8 = arith.subf %7, %6 : vector<64x256xf32>
    %9 = math.exp %8 : vector<64x256xf32>
    %cst_6 = arith.constant 1.000000e+00 : f32
    %10 = vector.broadcast %cst_6 : f32 to vector<64x256xf32>
    %11 = arith.addf %10, %9 : vector<64x256xf32>
    %12 = tpu.reciprocal %11 : vector<64x256xf32> -> vector<64x256xf32>
    %13 = arith.truncf %12 : vector<64x256xf32> to vector<64x256xbf16>
    %c0_7 = arith.constant 0 : index
    %c0_8 = arith.constant 0 : index
    %14 = vector.load %arg4[%c0_7, %c0_8] : memref<256x128xbf16, #tpu.memory_space<vmem>>, vector<256x128xbf16>
    %cst_9 = arith.constant dense<0.000000e+00> : vector<64x128xf32>
    %15 = tpu.matmul %13, %14, %cst_9 {dimension_numbers = #tpu.dot_dimension_numbers<[1], [0], [0], [1], [0, 0, 1, 1], [], []>} : vector<64x256xbf16>, vector<256x128xbf16>, vector<64x128xf32> -> vector<64x128xf32>
    %16 = vector.extract_strided_slice %15 {offsets = [0, 0], sizes = [64, 1], strides = [1, 1]} : vector<64x128xf32> to vector<64x1xf32>
    %c0_10 = arith.constant 0 : index
    %c0_11 = arith.constant 0 : index
    %17 = vector.load %arg5[%c0_10, %c0_11] : memref<1x1xf32, #tpu.memory_space<vmem>>, vector<1x1xf32>
    %18 = vector.broadcast %17 : vector<1x1xf32> to vector<64x1xf32>
    %19 = arith.addf %16, %18 : vector<64x1xf32>
    %c0_12 = arith.constant 0 : index
    %c0_13 = arith.constant 0 : index
    %20 = vector.load %arg6[%c0_12, %c0_13] : memref<64x1xf32, #tpu.memory_space<vmem>>, vector<64x1xf32>
    tpu.vector_store %arg6[%c0_12, %c0_13], %19 {strides = array<i32>} : memref<64x1xf32, #tpu.memory_space<vmem>>, vector<64x1xf32>,
    return
  }
  func.func @transform_0(%arg0: i32) -> (i32, i32) {
    %c0_i32 = arith.constant 0 : i32
    %c0_i32_0 = arith.constant 0 : i32
    return %arg0, %c0_i32 : i32, i32
  }
  func.func @transform_1(%arg0: i32) -> (i32, i32) {
    %c0_i32 = arith.constant 0 : i32
    %c0_i32_0 = arith.constant 0 : i32
    %c0_i32_1 = arith.constant 0 : i32
    return %c0_i32, %c0_i32_0 : i32, i32
  }
  func.func @transform_2(%arg0: i32) -> (i32, i32) {
    %c0_i32 = arith.constant 0 : i32
    %c0_i32_0 = arith.constant 0 : i32
    %c0_i32_1 = arith.constant 0 : i32
    return %c0_i32, %c0_i32_0 : i32, i32
  }
  func.func @transform_3(%arg0: i32) -> (i32, i32) {
    %c0_i32 = arith.constant 0 : i32
    %c0_i32_0 = arith.constant 0 : i32
    %c0_i32_1 = arith.constant 0 : i32
    return %c0_i32, %c0_i32_0 : i32, i32
  }
  func.func @transform_4(%arg0: i32) -> (i32, i32) {
    %c0_i32 = arith.constant 0 : i32
    %c0_i32_0 = arith.constant 0 : i32
    %c0_i32_1 = arith.constant 0 : i32
    return %c0_i32, %c0_i32_0 : i32, i32
  }
  func.func @transform_5(%arg0: i32) -> (i32, i32) {
    %c0_i32 = arith.constant 0 : i32
    %c0_i32_0 = arith.constant 0 : i32
    return %arg0, %c0_i32 : i32, i32
  }
}

</mosaic_0001>

<llo_original>
// kernel: tpu_custom_call.1
$region0: #{tpu_custom_call.1}
  #allocation0 [shape = 'u32[]', space=smem, size = 0x4, offset = 0x4, fixed_abs, tag = 'smem constant byte address 0x4 - core index']
  #allocation1 [shape = 'u32[144,128]{1,0:T(1,128)}', space=vmem, size = 0x12000, scoped, tag = 'internal scratch']
  #allocation2 [shape = 'f32[1,1]{1,0:T(1,128)S(1)}', space=vmem, size = 0x200, scoped, tag = 'scoped memory for tpu_custom_call.1']
  %s0 = inlined_call_operand.vmem [shape: f32[128,300], index: 0, kind: input, shape index: {}]
  %s1 = inlined_call_operand.vmem [shape: bf16[300,256], index: 1, kind: input, shape index: {}]
  %s2 = inlined_call_operand.vmem [shape: f32[1,256], index: 2, kind: input, shape index: {}]
  %s3 = inlined_call_operand.vmem [shape: bf16[256,128], index: 3, kind: input, shape index: {}]
  %s4 = inlined_call_operand.<no memory space> [shape: f32[1,1], index: 4, kind: input, shape index: {}]
  %s5 = inlined_call_operand.vmem [shape: f32[128,1], index: 5, kind: output, shape index: {}]
  %s6 = sld [smem:[#allocation0]]
  $region53: #{tpu_custom_call.1} parent=0
    _
  %s8 = ssub.s32 1, %s6
  %s9 = scalar_select 0, %s8, %s6
  %v10 = vstv %s4
  %11 = vst [vmem:[#allocation2] sm:$0x1] %v10
  loop: start=0, step=1, limit=4
  $region2: #{tpu_custom_call.1} parent=0 // loop_pre_header
    _
  $region3: #{tpu_custom_call.1} parent=0 // loop_header
    %s13 = sphi 0, %s17
    %p14 = scmp.ge.s32.totalorder %s13, 4
    %s23 = sphi 0, %s25
    %s26 = sphi 0, %s23
    %s27 = sphi 0, %s26
    %s43 = sphi 0, %s27
    %s47 = sphi 0, %s47
    %s49 = sphi 0, %s47
    %s50 = sphi 0, %s49
    %s64 = sphi 0, %s50
    %s68 = sphi 0, %s68
    %s70 = sphi 0, %s68
    %s71 = sphi 0, %s70
    %s85 = sphi 0, %s71
    %s89 = sphi 0, %s89
    %s91 = sphi 0, %s89
    %s92 = sphi 0, %s91
    %s106 = sphi 0, %s92
    %s110 = sphi 0, %s110
    %s112 = sphi 0, %s110
    %s113 = sphi 0, %s112
    %s127 = sphi 0, %s113
    %s133 = sphi 0, %s135
    %s136 = sphi 0, %s133
    %s137 = sphi 0, %s136
    %s153 = sphi 0, %s137
  $region4: #{tpu_custom_call.1} parent=0 // loop_header_branch
    %16 = sbr.rel (%p14) target = $region8
  $region5: #{tpu_custom_call.1} parent=0 // loop_body
    %s18 = ssub.s32 %s13, 1
    %s19 = ssub.s32 %s13, 2
    %s20 = sadd.s32 %s13, 1
    %s21 = ssub.s32 %s13, %s20
    %p22 = scmp.eq.s32.totalorder %s21, 0
    %s24 = sadd.s32 %s23, 1
    %s25 = scalar_select %p22, %s23, %s24
    %p28 = pneg %p22
    %p29 = scmp.eq.s32.totalorder %s13, 1
    %p30 = por %p28, %p29
    %p31 = scmp.ne.s32.totalorder %s23, %s26
    %p32 = scmp.eq.s32.totalorder %s13, 0
    %p33 = por %p31, %p32
    %p34 = scmp.ne.s32.totalorder %s23, %s26
    %p35 = scmp.eq.s32.totalorder %s18, 1
    %p36 = por %p34, %p35
    %p37 = scmp.ne.s32.totalorder %s26, %s27
    %p38 = scmp.eq.s32.totalorder %s18, 0
    %p39 = por %p37, %p38
    %p40 = scmp.ne.s32.totalorder %s26, %s27
    %p41 = scmp.eq.s32.totalorder %s19, 1
    %p42 = por %p40, %p41
    %p44 = scmp.ne.s32.totalorder %s27, %s43
    %p45 = scmp.eq.s32.totalorder %s19, 0
    %p46 = por %p44, %p45
    %s48 = sadd.s32 %s47, 1
    %p51 = scmp.eq.s32.totalorder %s13, 1
    %p52 = scmp.ne.s32.totalorder %s47, %s49
    %p53 = scmp.eq.s32.totalorder %s13, 0
    %p54 = por %p52, %p53
    %p55 = scmp.ne.s32.totalorder %s47, %s49
    %p56 = scmp.eq.s32.totalorder %s18, 1
    %p57 = por %p55, %p56
    %p58 = scmp.ne.s32.totalorder %s49, %s50
    %p59 = scmp.eq.s32.totalorder %s18, 0
    %p60 = por %p58, %p59
    %p61 = scmp.ne.s32.totalorder %s49, %s50
    %p62 = scmp.eq.s32.totalorder %s19, 1
    %p63 = por %p61, %p62
    %p65 = scmp.ne.s32.totalorder %s50, %s64
    %p66 = scmp.eq.s32.totalorder %s19, 0
    %p67 = por %p65, %p66
    %s69 = sadd.s32 %s68, 1
    %p72 = scmp.eq.s32.totalorder %s13, 1
    %p73 = scmp.ne.s32.totalorder %s68, %s70
    %p74 = scmp.eq.s32.totalorder %s13, 0
    %p75 = por %p73, %p74
    %p76 = scmp.ne.s32.totalorder %s68, %s70
    %p77 = scmp.eq.s32.totalorder %s18, 1
    %p78 = por %p76, %p77
    %p79 = scmp.ne.s32.totalorder %s70, %s71
    %p80 = scmp.eq.s32.totalorder %s18, 0
    %p81 = por %p79, %p80
    %p82 = scmp.ne.s32.totalorder %s70, %s71
    %p83 = scmp.eq.s32.totalorder %s19, 1
    %p84 = por %p82, %p83
    %p86 = scmp.ne.s32.totalorder %s71, %s85
    %p87 = scmp.eq.s32.totalorder %s19, 0
    %p88 = por %p86, %p87
    %s90 = sadd.s32 %s89, 1
    %p93 = scmp.eq.s32.totalorder %s13, 1
    %p94 = scmp.ne.s32.totalorder %s89, %s91
    %p95 = scmp.eq.s32.totalorder %s13, 0
    %p96 = por %p94, %p95
    %p97 = scmp.ne.s32.totalorder %s89, %s91
    %p98 = scmp.eq.s32.totalorder %s18, 1
    %p99 = por %p97, %p98
    %p100 = scmp.ne.s32.totalorder %s91, %s92
    %p101 = scmp.eq.s32.totalorder %s18, 0
    %p102 = por %p100, %p101
    %p103 = scmp.ne.s32.totalorder %s91, %s92
    %p104 = scmp.eq.s32.totalorder %s19, 1
    %p105 = por %p103, %p104
    %p107 = scmp.ne.s32.totalorder %s92, %s106
    %p108 = scmp.eq.s32.totalorder %s19, 0
    %p109 = por %p107, %p108
    %s111 = sadd.s32 %s110, 1
    %p114 = scmp.eq.s32.totalorder %s13, 1
    %p115 = scmp.ne.s32.totalorder %s110, %s112
    %p116 = scmp.eq.s32.totalorder %s13, 0
    %p117 = por %p115, %p116
    %p118 = scmp.ne.s32.totalorder %s110, %s112
    %p119 = scmp.eq.s32.totalorder %s18, 1
    %p120 = por %p118, %p119
    %p121 = scmp.ne.s32.totalorder %s112, %s113
    %p122 = scmp.eq.s32.totalorder %s18, 0
    %p123 = por %p121, %p122
    %p124 = scmp.ne.s32.totalorder %s112, %s113
    %p125 = scmp.eq.s32.totalorder %s19, 1
    %p126 = por %p124, %p125
    %p128 = scmp.ne.s32.totalorder %s113, %s127
    %p129 = scmp.eq.s32.totalorder %s19, 0
    %p130 = por %p128, %p129
    %s131 = ssub.s32 %s13, %s20
    %p132 = scmp.eq.s32.totalorder %s131, 0
    %s134 = sadd.s32 %s133, 1
    %s135 = scalar_select %p132, %s133, %s134
    %p138 = pneg %p132
    %p139 = scmp.eq.s32.totalorder %s13, 1
    %p140 = por %p138, %p139
    %p141 = scmp.ne.s32.totalorder %s133, %s136
    %p142 = scmp.eq.s32.totalorder %s13, 0
    %p143 = por %p141, %p142
    %p144 = scmp.ne.s32.totalorder %s133, %s136
    %p145 = scmp.eq.s32.totalorder %s18, 1
    %p146 = por %p144, %p145
    %p147 = scmp.ne.s32.totalorder %s136, %s137
    %p148 = scmp.eq.s32.totalorder %s18, 0
    %p149 = por %p147, %p148
    %p150 = scmp.ne.s32.totalorder %s136, %s137
    %p151 = scmp.eq.s32.totalorder %s19, 1
    %p152 = por %p150, %p151
    %p154 = scmp.ne.s32.totalorder %s137, %s153
    %p155 = scmp.eq.s32.totalorder %s19, 0
    %p156 = por %p154, %p155
    %p157 = scmp.le.s32.totalorder 1, %s13
    %p158 = scmp.lt.s32.totalorder %s13, 3
    %p159 = pnand %p157, %p158
    %p160 = pneg %p159
    // Predicated region
    $region9: #{tpu_custom_call.1} parent=5 // pred_check
      _
    $region10: #{tpu_custom_call.1} parent=5 // pred_check_branch
      %162 = sbr.rel (%p159) target = $region12
    $region11: #{tpu_custom_call.1} parent=5 // pred_region
      %s163 = ssub.s32 %s13, 1
      // Predicated region
      $region13: #{tpu_custom_call.1} parent=11 // pred_check
        %p164 = pneg %p60
      $region14: #{tpu_custom_call.1} parent=11 // pred_check_branch
        %166 = sbr.rel (%p164) target = $region16
      $region15: #{tpu_custom_call.1} parent=11 // pred_region
        _
      $region16: #{tpu_custom_call.1} parent=11 // pred_fallthru
        _
      // Predicated region
      $region17: #{tpu_custom_call.1} parent=11 // pred_check
        %p167 = pneg %p81
      $region18: #{tpu_custom_call.1} parent=11 // pred_check_branch
        %169 = sbr.rel (%p167) target = $region20
      $region19: #{tpu_custom_call.1} parent=11 // pred_region
        _
      $region20: #{tpu_custom_call.1} parent=11 // pred_fallthru
        _
      // Predicated region
      $region21: #{tpu_custom_call.1} parent=11 // pred_check
        %p170 = pneg %p102
      $region22: #{tpu_custom_call.1} parent=11 // pred_check_branch
        %172 = sbr.rel (%p170) target = $region24
      $region23: #{tpu_custom_call.1} parent=11 // pred_region
        _
      $region24: #{tpu_custom_call.1} parent=11 // pred_fallthru
        _
      // Predicated region
      $region25: #{tpu_custom_call.1} parent=11 // pred_check
        %p173 = pneg %p123
      $region26: #{tpu_custom_call.1} parent=11 // pred_check_branch
        %175 = sbr.rel (%p173) target = $region28
      $region27: #{tpu_custom_call.1} parent=11 // pred_region
        _
      $region28: #{tpu_custom_call.1} parent=11 // pred_fallthru
        _
    $region12: #{tpu_custom_call.1} parent=5 // pred_fallthru
      _
    %p176 = scmp.lt.s32.totalorder %s13, 2
    // Predicated region
    $region29: #{tpu_custom_call.1} parent=5 // pred_check
      %p177 = pneg %p176
    $region30: #{tpu_custom_call.1} parent=5 // pred_check_branch
      %179 = sbr.rel (%p177) target = $region32
    $region31: #{tpu_custom_call.1} parent=5 // pred_region
      // Predicated region
      $region33: #{tpu_custom_call.1} parent=31 // pred_check
        %p180 = pneg %p33
      $region34: #{tpu_custom_call.1} parent=31 // pred_check_branch
        %182 = sbr.rel (%p180) target = $region36
      $region35: #{tpu_custom_call.1} parent=31 // pred_region
        %s183 = smul.u32 8, %s13
        %p184 = scmp.lt.s32.totalorder %s183, 15
        %s185 = scalar_select %p184, %s183, 15
        %s186 = smul.addr %s185, 3
        %s187 = smul.addr %s186, 8
        %s188 = scalar_lea.vmem %s0, %s187
        %s189 = smul.u32 8, %s13
      $region36: #{tpu_custom_call.1} parent=31 // pred_fallthru
        _
    $region32: #{tpu_custom_call.1} parent=5 // pred_fallthru
      _
    %p190 = scmp.le.s32.totalorder 1, %s13
    %p191 = scmp.lt.s32.totalorder %s13, 3
    %p192 = pnand %p190, %p191
    %p193 = pneg %p192
    // Predicated region
    $region37: #{tpu_custom_call.1} parent=5 // pred_check
      _
    $region38: #{tpu_custom_call.1} parent=5 // pred_check_branch
      %195 = sbr.rel (%p192) target = $region40
    $region39: #{tpu_custom_call.1} parent=5 // pred_region
      %s196 = ssub.s32 %s13, 1
      %s197 = smul.u32 8, %s18
      %p198 = scmp.lt.s32.totalorder %s197, 15
      %s199 = scalar_select %p198, %s197, 15
      %s200 = smul.addr %s199, 3
      %s201 = smul.addr %s200, 8
      %s202 = scalar_lea.vmem %s0, %s201
      %p203 = pneg %p39
      %p204 = pneg %p36
      %p205 = pneg %p60
      %p206 = pneg %p57
      %p207 = pneg %p81
      %p208 = pneg %p78
      %p209 = pneg %p102
      %p210 = pneg %p99
      %p211 = pneg %p123
      %p212 = pneg %p120
      %p213 = pneg %p149
      %p214 = pneg %p146
      %s215 = smul.u32 8, %s18
      %p216 = scmp.lt.s32.totalorder %s215, 15
      %s217 = scalar_select %p216, %s215, 15
      %s218 = smul.addr %s217, 8
      %s219 = scalar_lea.vmem %s5, %s218
      %s220 = smul.u32 8, %s18
      %p221 = scmp.lt.s32.totalorder %s220, 15
      %s222 = scalar_select %p221, %s220, 15
      %s223 = smul.addr %s222, 3
      %s224 = smul.addr %s223, 8
      %s225 = scalar_lea.vmem %s0, %s224
      %s226 = smul.u32 8, %s18
      %s227 = smul.u32 8, %s18
      %p228 = scmp.lt.s32.totalorder %s227, 15
      %s229 = scalar_select %p228, %s227, 15
      %s230 = smul.addr %s229, 8
      %s231 = scalar_lea.vmem %s5, %s230
      %s232 = smul.u32 8, %s18
      %v234 = vld [vmem:[%s225] sm:$0xff]
      %v235 = vld [vmem:[%s225 + $0x8] sm:$0xff]
      %v236 = vld [vmem:[%s225 + $0x10] sm:$0xff]
      %v237 = vld [vmem:[%s225 + $0x18] sm:$0xff]
      %v238 = vld [vmem:[%s225 + $0x20] sm:$0xff]
      %v239 = vld [vmem:[%s225 + $0x28] sm:$0xff]
      %v240 = vld [vmem:[%s225 + $0x30] sm:$0xff]
      %v241 = vld [vmem:[%s225 + $0x38] sm:$0xff]
      %v242 = vld [vmem:[%s225 + $0x40] sm:$0xff]
      %v243 = vld [vmem:[%s225 + $0x48] sm:$0xff]
      %v244 = vld [vmem:[%s225 + $0x50] sm:$0xff]
      %v245 = vld [vmem:[%s225 + $0x58] sm:$0xff]
      %v246 = vld [vmem:[%s225 + $0x60] sm:$0xff]
      %v247 = vld [vmem:[%s225 + $0x68] sm:$0xff]
      %v248 = vld [vmem:[%s225 + $0x70] sm:$0xff]
      %v249 = vld [vmem:[%s225 + $0x78] sm:$0xff]
      %v250 = vld [vmem:[%s225 + $0x80] sm:$0xff]
      %v251 = vld [vmem:[%s225 + $0x88] sm:$0xff]
      %v252 = vld [vmem:[%s225 + $0x90] sm:$0xff]
      %v253 = vld [vmem:[%s225 + $0x98] sm:$0xff]
      %v254 = vld [vmem:[%s225 + $0xa0] sm:$0xff]
      %v255 = vld [vmem:[%s225 + $0xa8] sm:$0xff]
      %v256 = vld [vmem:[%s225 + $0xb0] sm:$0xff]
      %v257 = vld [vmem:[%s225 + $0xb8] sm:$0xff]
      %v258 = vpack.c.bf16 %v237, %v234
      %v259 = vpack.c.bf16 %v238, %v235
      %v260 = vpack.c.bf16 %v239, %v236
      %v261 = vpack.c.bf16 %v243, %v240
      %v262 = vpack.c.bf16 %v244, %v241
      %v263 = vpack.c.bf16 %v245, %v242
      %v264 = vpack.c.bf16 %v249, %v246
      %v265 = vpack.c.bf16 %v250, %v247
      %v266 = vpack.c.bf16 %v251, %v248
      %v267 = vpack.c.bf16 %v255, %v252
      %v268 = vpack.c.bf16 %v256, %v253
      %v269 = vpack.c.bf16 %v257, %v254
      %v270 = vld [vmem:[%s1] sm:$0xff]
      %v271 = vld [vmem:[%s1 + $0x8] sm:$0xff]
      %v272 = vld [vmem:[%s1 + $0x10] sm:$0xff]
      %v273 = vld [vmem:[%s1 + $0x18] sm:$0xff]
      %v274 = vld [vmem:[%s1 + $0x20] sm:$0xff]
      %v275 = vld [vmem:[%s1 + $0x28] sm:$0xff]
      %v276 = vld [vmem:[%s1 + $0x30] sm:$0xff]
      %v277 = vld [vmem:[%s1 + $0x38] sm:$0xff]
      %v278 = vld [vmem:[%s1 + $0x40] sm:$0xff]
      %v279 = vld [vmem:[%s1 + $0x48] sm:$0xff]
      %v280 = vld [vmem:[%s1 + $0x50] sm:$0xff]
      %v281 = vld [vmem:[%s1 + $0x58] sm:$0xff]
      %v282 = vld [vmem:[%s1 + $0x60] sm:$0xff]
      %v283 = vld [vmem:[%s1 + $0x68] sm:$0xff]
      %v284 = vld [vmem:[%s1 + $0x70] sm:$0xff]
      %v285 = vld [vmem:[%s1 + $0x78] sm:$0xff]
      %v286 = vld [vmem:[%s1 + $0x80] sm:$0xff]
      %v287 = vld [vmem:[%s1 + $0x88] sm:$0xff]
      %v288 = vld [vmem:[%s1 + $0x90] sm:$0xff]
      %v289 = vld [vmem:[%s1 + $0x98] sm:$0xff]
      %v290 = vld [vmem:[%s1 + $0xa0] sm:$0xff]
      %v291 = vld [vmem:[%s1 + $0xa8] sm:$0xff]
      %v292 = vld [vmem:[%s1 + $0xb0] sm:$0xff]
      %v293 = vld [vmem:[%s1 + $0xb8] sm:$0xff]
      %v294 = vld [vmem:[%s1 + $0xc0] sm:$0xff]
      %v295 = vld [vmem:[%s1 + $0xc8] sm:$0xff]
      %v296 = vld [vmem:[%s1 + $0xd0] sm:$0xff]
      %v297 = vld [vmem:[%s1 + $0xd8] sm:$0xff]
      %v298 = vld [vmem:[%s1 + $0xe0] sm:$0xff]
      %v299 = vld [vmem:[%s1 + $0xe8] sm:$0xff]
      %v300 = vld [vmem:[%s1 + $0xf0] sm:$0xff]
      %v301 = vld [vmem:[%s1 + $0xf8] sm:$0xff]
      %v302 = vld [vmem:[%s1 + $0x100] sm:$0xff]
      %v303 = vld [vmem:[%s1 + $0x108] sm:$0xff]
      %v304 = vld [vmem:[%s1 + $0x110] sm:$0xff]
      %v305 = vld [vmem:[%s1 + $0x118] sm:$0xff]
      %v306 = vld [vmem:[%s1 + $0x120] sm:$0xff]
      %v307 = vld [vmem:[%s1 + $0x128] sm:$0x33]
      %v308 = vld [vmem:[%s2] sm:$0x3]
      %v310 = vlaneseq
      %v311 = vshrl.u32 %v310, 7
      %v312 = vsub.s32 0, %v311
      %v313 = vrot.slane %v308, %v312
      %v314 = vlaneseq
      %v315 = vshrl.u32 %v314, 7
      %v316 = vsub.s32 1, %v315
      %v317 = vrot.slane %v308, %v316
      %v358 = vunpack.c.l.b16 %v270
      %v359 = vunpack.c.h.b16 %v270
      %v360 = vunpack.c.l.b16 %v271
      %v361 = vunpack.c.h.b16 %v271
      %v362 = vunpack.c.l.b16 %v272
      %v363 = vunpack.c.h.b16 %v272
      %v364 = vunpack.c.l.b16 %v273
      %v365 = vunpack.c.h.b16 %v273
      %v366 = vunpack.c.l.b16 %v274
      %v367 = vunpack.c.h.b16 %v274
      %v368 = vunpack.c.l.b16 %v275
      %v369 = vunpack.c.h.b16 %v275
      %v370 = vunpack.c.l.b16 %v276
      %v371 = vunpack.c.h.b16 %v276
      %v372 = vunpack.c.l.b16 %v277
      %v373 = vunpack.c.h.b16 %v277
      %v374 = vunpack.c.l.b16 %v278
      %v375 = vunpack.c.h.b16 %v278
      %v376 = vunpack.c.l.b16 %v279
      %v377 = vunpack.c.h.b16 %v279
      %v378 = vunpack.c.l.b16 %v280
      %v379 = vunpack.c.h.b16 %v280
      %v380 = vunpack.c.l.b16 %v281
      %v381 = vunpack.c.h.b16 %v281
      %v382 = vunpack.c.l.b16 %v282
      %v383 = vunpack.c.h.b16 %v282
      %v384 = vunpack.c.l.b16 %v283
      %v385 = vunpack.c.h.b16 %v283
      %v386 = vunpack.c.l.b16 %v284
      %v387 = vunpack.c.h.b16 %v284
      %v388 = vunpack.c.l.b16 %v285
      %v389 = vunpack.c.h.b16 %v285
      %v390 = vunpack.c.l.b16 %v286
      %v391 = vunpack.c.h.b16 %v286
      %v392 = vunpack.c.l.b16 %v287
      %v393 = vunpack.c.h.b16 %v287
      %v394 = vunpack.c.l.b16 %v288
      %v395 = vunpack.c.h.b16 %v288
      %v396 = vunpack.c.l.b16 %v289
      %v397 = vunpack.c.h.b16 %v289
      %v398 = vunpack.c.l.b16 %v290
      %v399 = vunpack.c.h.b16 %v290
      %v400 = vunpack.c.l.b16 %v291
      %v401 = vunpack.c.h.b16 %v291
      %v402 = vunpack.c.l.b16 %v292
      %v403 = vunpack.c.h.b16 %v292
      %v404 = vunpack.c.l.b16 %v293
      %v405 = vunpack.c.h.b16 %v293
      %v406 = vunpack.c.l.b16 %v294
      %v407 = vunpack.c.h.b16 %v294
      %v408 = vunpack.c.l.b16 %v295
      %v409 = vunpack.c.h.b16 %v295
      %v410 = vunpack.c.l.b16 %v296
      %v411 = vunpack.c.h.b16 %v296
      %v412 = vunpack.c.l.b16 %v297
      %v413 = vunpack.c.h.b16 %v297
      %v414 = vunpack.c.l.b16 %v298
      %v415 = vunpack.c.h.b16 %v298
      %v416 = vunpack.c.l.b16 %v299
      %v417 = vunpack.c.h.b16 %v299
      %v418 = vunpack.c.l.b16 %v300
      %v419 = vunpack.c.h.b16 %v300
      %v420 = vunpack.c.l.b16 %v301
      %v421 = vunpack.c.h.b16 %v301
      %v422 = vunpack.c.l.b16 %v302
      %v423 = vunpack.c.h.b16 %v302
      %v424 = vunpack.c.l.b16 %v303
      %v425 = vunpack.c.h.b16 %v303
      %v426 = vunpack.c.l.b16 %v304
      %v427 = vunpack.c.h.b16 %v304
      %v428 = vunpack.c.l.b16 %v305
      %v429 = vunpack.c.h.b16 %v305
      %v430 = vunpack.c.l.b16 %v306
      %v431 = vunpack.c.h.b16 %v306
      %v432 = vunpack.c.l.b16 %v307
      %v433 = vunpack.c.h.b16 %v307
      %v434 = vpack.c.b16 %v360, %v358
      %v435 = vpack.c.b16 %v361, %v359
      %v436 = vpack.c.b16 %v364, %v362
      %v437 = vpack.c.b16 %v365, %v363
      %v438 = vpack.c.b16 %v368, %v366
      %v439 = vpack.c.b16 %v369, %v367
      %v440 = vpack.c.b16 %v372, %v370
      %v441 = vpack.c.b16 %v373, %v371
      %v442 = vpack.c.b16 %v376, %v374
      %v443 = vpack.c.b16 %v377, %v375
      %v444 = vpack.c.b16 %v380, %v378
      %v445 = vpack.c.b16 %v381, %v379
      %v446 = vpack.c.b16 %v384, %v382
      %v447 = vpack.c.b16 %v385, %v383
      %v448 = vpack.c.b16 %v388, %v386
      %v449 = vpack.c.b16 %v389, %v387
      %v450 = vpack.c.b16 %v392, %v390
      %v451 = vpack.c.b16 %v393, %v391
      %v452 = vpack.c.b16 %v396, %v394
      %v453 = vpack.c.b16 %v397, %v395
      %v454 = vpack.c.b16 %v400, %v398
      %v455 = vpack.c.b16 %v401, %v399
      %v456 = vpack.c.b16 %v404, %v402
      %v457 = vpack.c.b16 %v405, %v403
      %v458 = vpack.c.b16 %v408, %v406
      %v459 = vpack.c.b16 %v409, %v407
      %v460 = vpack.c.b16 %v412, %v410
      %v461 = vpack.c.b16 %v413, %v411
      %v462 = vpack.c.b16 %v416, %v414
      %v463 = vpack.c.b16 %v417, %v415
      %v464 = vpack.c.b16 %v420, %v418
      %v465 = vpack.c.b16 %v421, %v419
      %v466 = vpack.c.b16 %v424, %v422
      %v467 = vpack.c.b16 %v425, %v423
      %v468 = vpack.c.b16 %v428, %v426
      %v469 = vpack.c.b16 %v429, %v427
      %v470 = vpack.c.b16 %v432, %v430
      %v471 = vpack.c.b16 %v433, %v431
      %vm508 = vcmask 359424
      %v510 = vsel %vm508, %v260, 0
      %v513 = vsel %vm508, %v263, 0
      %v516 = vsel %vm508, %v266, 0
      %v519 = vsel %vm508, %v269, 0
      %vm521 = vcmask 1045504
      %v523 = vsel %vm521, %v470, 0
      %v526 = vsel %vm521, %v471, 0
      %528 = vmatprep.subr.bf16.mxu0 %v449
      %529 = vmatpush1.bf16.msra.mxu0 %v448
      %530 = vmatprep.subr.bf16.mxu0 %v447
      %531 = vmatpush1.bf16.msra.mxu0 %v446
      %532 = vmatprep.subr.bf16.mxu0 %v445
      %533 = vmatpush1.bf16.msra.mxu0 %v444
      %534 = vmatprep.subr.bf16.mxu0 %v443
      %535 = vmatpush1.bf16.msra.mxu0 %v442
      %536 = vmatprep.subr.bf16.mxu0 %v441
      %537 = vmatpush1.bf16.msra.mxu0 %v440
      %538 = vmatprep.subr.bf16.mxu0 %v439
      %539 = vmatpush1.bf16.msra.mxu0 %v438
      %540 = vmatprep.subr.bf16.mxu0 %v437
      %541 = vmatpush1.bf16.msra.mxu0 %v436
      %542 = vmatprep.subr.bf16.mxu0 %v435
      %543 = vmatpush1.bf16.msra.mxu0 %v434
      %544 = vmatprep.subr.bf16.mxu0 %v465
      %545 = vmatpush2.bf16.msra.mxu0 %v464
      %546 = vmatprep.subr.bf16.mxu0 %v463
      %547 = vmatpush2.bf16.msra.mxu0 %v462
      %548 = vmatprep.subr.bf16.mxu0 %v461
      %549 = vmatpush2.bf16.msra.mxu0 %v460
      %550 = vmatprep.subr.bf16.mxu0 %v459
      %551 = vmatpush2.bf16.msra.mxu0 %v458
      %552 = vmatprep.subr.bf16.mxu0 %v457
      %553 = vmatpush2.bf16.msra.mxu0 %v456
      %554 = vmatprep.subr.bf16.mxu0 %v455
      %555 = vmatpush2.bf16.msra.mxu0 %v454
      %556 = vmatprep.subr.bf16.mxu0 %v453
      %557 = vmatpush2.bf16.msra.mxu0 %v452
      %558 = vmatprep.subr.bf16.mxu0 %v451
      %559 = vmatpush2.bf16.msra.mxu0 %v450
      %560 = vmatprep.mubr.bf16.mxu0 %v259
      %561 = vmatmul.mubr.bf16.gmra.mxu0 %v258
      %v562 = vpop.f32.mrf.mxu0
      %v563 = vadd.f32 %v313, %v562
      %v564 = vpop.f32.mrf.mxu0
      %v565 = vadd.f32 %v317, %v564
      %v566 = vpop.f32.mrf.mxu0
      %v567 = vadd.f32 %v313, %v566
      %v568 = vpop.f32.mrf.mxu0
      %v569 = vadd.f32 %v317, %v568
      %570 = vmatprep.mubr.bf16.mxu0 %v262
      %571 = vmatmul.mubr.bf16.gmra.mxu0 %v261
      %v572 = vpop.f32.mrf.mxu0
      %v573 = vadd.f32 %v313, %v572
      %v574 = vpop.f32.mrf.mxu0
      %v575 = vadd.f32 %v317, %v574
      %v576 = vpop.f32.mrf.mxu0
      %v577 = vadd.f32 %v313, %v576
      %v578 = vpop.f32.mrf.mxu0
      %v579 = vadd.f32 %v317, %v578
      %580 = vmatprep.mubr.bf16.mxu0 %v265
      %581 = vmatmul.mubr.bf16.gmra.mxu0 %v264
      %v582 = vpop.f32.mrf.mxu0
      %v583 = vadd.f32 %v313, %v582
      %v584 = vpop.f32.mrf.mxu0
      %v585 = vadd.f32 %v317, %v584
      %v586 = vpop.f32.mrf.mxu0
      %v587 = vadd.f32 %v313, %v586
      %v588 = vpop.f32.mrf.mxu0
      %v589 = vadd.f32 %v317, %v588
      %590 = vmatprep.mubr.bf16.mxu0 %v268
      %591 = vmatmul.mubr.bf16.gmra.mxu0 %v267
      %v592 = vpop.f32.mrf.mxu0
      %v593 = vadd.f32 %v313, %v592
      %v594 = vpop.f32.mrf.mxu0
      %v595 = vadd.f32 %v317, %v594
      %v596 = vpop.f32.mrf.mxu0
      %v597 = vadd.f32 %v313, %v596
      %v598 = vpop.f32.mrf.mxu0
      %v599 = vadd.f32 %v317, %v598
      %600 = vdwg.mxu0
      %601 = vmatprep.subr.bf16.mxu0 0
      %602 = vmatpush1.bf16.msra.mxu0 0
      %603 = vmatprep.subr.bf16.mxu0 0
      %604 = vmatpush1.bf16.msra.mxu0 0
      %605 = vmatprep.subr.bf16.mxu0 0
      %606 = vmatpush1.bf16.msra.mxu0 0
      %607 = vmatprep.subr.bf16.mxu0 0
      %608 = vmatpush1.bf16.msra.mxu0 0
      %609 = vmatprep.subr.bf16.mxu0 0
      %610 = vmatpush1.bf16.msra.mxu0 0
      %611 = vmatprep.subr.bf16.mxu0 %v526
      %612 = vmatpush1.bf16.msra.mxu0 %v523
      %613 = vmatprep.subr.bf16.mxu0 %v469
      %614 = vmatpush1.bf16.msra.mxu0 %v468
      %615 = vmatprep.subr.bf16.mxu0 %v467
      %616 = vmatpush1.bf16.msra.mxu0 %v466
      %617 = vmatprep.subr.bf16.mxu0 0
      %618 = vmatpush2.bf16.msra.mxu0 0
      %619 = vmatprep.subr.bf16.mxu0 0
      %620 = vmatpush2.bf16.msra.mxu0 0
      %621 = vmatprep.subr.bf16.mxu0 0
      %622 = vmatpush2.bf16.msra.mxu0 0
      %623 = vmatprep.subr.bf16.mxu0 0
      %624 = vmatpush2.bf16.msra.mxu0 0
      %625 = vmatprep.subr.bf16.mxu0 0
      %626 = vmatpush2.bf16.msra.mxu0 0
      %627 = vmatprep.subr.bf16.mxu0 0
      %628 = vmatpush2.bf16.msra.mxu0 0
      %629 = vmatprep.subr.bf16.mxu0 0
      %630 = vmatpush2.bf16.msra.mxu0 0
      %631 = vmatprep.subr.bf16.mxu0 0
      %632 = vmatpush2.bf16.msra.mxu0 0
      %633 = vmatprep.mubr.bf16.mxu0 0
      %634 = vmatmul.mubr.bf16.gmra.mxu0 %v510
      %v635 = vpop.f32.mrf.mxu0
      %v636 = vadd.f32 %v563, %v635
      %v637 = vpop.f32.mrf.mxu0
      %v638 = vadd.f32 %v565, %v637
      %v639 = vpop.f32.mrf.mxu0
      %v640 = vadd.f32 %v567, %v639
      %v641 = vpop.f32.mrf.mxu0
      %v642 = vadd.f32 %v569, %v641
      %643 = vmatprep.mubr.bf16.mxu0 0
      %644 = vmatmul.mubr.bf16.gmra.mxu0 %v513
      %v645 = vpop.f32.mrf.mxu0
      %v646 = vadd.f32 %v573, %v645
      %v647 = vpop.f32.mrf.mxu0
      %v648 = vadd.f32 %v575, %v647
      %v649 = vpop.f32.mrf.mxu0
      %v650 = vadd.f32 %v577, %v649
      %v651 = vpop.f32.mrf.mxu0
      %v652 = vadd.f32 %v579, %v651
      %653 = vmatprep.mubr.bf16.mxu0 0
      %654 = vmatmul.mubr.bf16.gmra.mxu0 %v516
      %v655 = vpop.f32.mrf.mxu0
      %v656 = vadd.f32 %v583, %v655
      %v657 = vpop.f32.mrf.mxu0
      %v658 = vadd.f32 %v585, %v657
      %v659 = vpop.f32.mrf.mxu0
      %v660 = vadd.f32 %v587, %v659
      %v661 = vpop.f32.mrf.mxu0
      %v662 = vadd.f32 %v589, %v661
      %663 = vmatprep.mubr.bf16.mxu0 0
      %664 = vmatmul.mubr.bf16.gmra.mxu0 %v519
      %v665 = vpop.f32.mrf.mxu0
      %v666 = vadd.f32 %v593, %v665
      %v667 = vpop.f32.mrf.mxu0
      %v668 = vadd.f32 %v595, %v667
      %v669 = vpop.f32.mrf.mxu0
      %v670 = vadd.f32 %v597, %v669
      %v671 = vpop.f32.mrf.mxu0
      %v672 = vadd.f32 %v599, %v671
      %673 = vdwg.mxu0
      %v674 = vsub.f32 0.0, %v636
      %v675 = vsub.f32 0.0, %v638
      %v676 = vsub.f32 0.0, %v640
      %v677 = vsub.f32 0.0, %v642
      %v678 = vsub.f32 0.0, %v646
      %v679 = vsub.f32 0.0, %v648
      %v680 = vsub.f32 0.0, %v650
      %v681 = vsub.f32 0.0, %v652
      %v682 = vsub.f32 0.0, %v656
      %v683 = vsub.f32 0.0, %v658
      %v684 = vsub.f32 0.0, %v660
      %v685 = vsub.f32 0.0, %v662
      %v686 = vsub.f32 0.0, %v666
      %v687 = vsub.f32 0.0, %v668
      %v688 = vsub.f32 0.0, %v670
      %v689 = vsub.f32 0.0, %v672
      %v690 = vmul.f32 %v674, 1.442695
      %v691 = vpow.pop %v690
      %v692 = vmul.f32 %v675, 1.442695
      %v693 = vpow.pop %v692
      %v694 = vmul.f32 %v676, 1.442695
      %v695 = vpow.pop %v694
      %v696 = vmul.f32 %v677, 1.442695
      %v697 = vpow.pop %v696
      %v698 = vmul.f32 %v678, 1.442695
      %v699 = vpow.pop %v698
      %v700 = vmul.f32 %v679, 1.442695
      %v701 = vpow.pop %v700
      %v702 = vmul.f32 %v680, 1.442695
      %v703 = vpow.pop %v702
      %v704 = vmul.f32 %v681, 1.442695
      %v705 = vpow.pop %v704
      %v706 = vmul.f32 %v682, 1.442695
      %v707 = vpow.pop %v706
      %v708 = vmul.f32 %v683, 1.442695
      %v709 = vpow.pop %v708
      %v710 = vmul.f32 %v684, 1.442695
      %v711 = vpow.pop %v710
      %v712 = vmul.f32 %v685, 1.442695
      %v713 = vpow.pop %v712
      %v714 = vmul.f32 %v686, 1.442695
      %v715 = vpow.pop %v714
      %v716 = vmul.f32 %v687, 1.442695
      %v717 = vpow.pop %v716
      %v718 = vmul.f32 %v688, 1.442695
      %v719 = vpow.pop %v718
      %v720 = vmul.f32 %v689, 1.442695
      %v721 = vpow.pop %v720
      %v722 = vadd.f32 %v691, 1.0
      %v723 = vadd.f32 %v693, 1.0
      %v724 = vadd.f32 %v695, 1.0
      %v725 = vadd.f32 %v697, 1.0
      %v726 = vadd.f32 %v699, 1.0
      %v727 = vadd.f32 %v701, 1.0
      %v728 = vadd.f32 %v703, 1.0
      %v729 = vadd.f32 %v705, 1.0
      %v730 = vadd.f32 %v707, 1.0
      %v731 = vadd.f32 %v709, 1.0
      %v732 = vadd.f32 %v711, 1.0
      %v733 = vadd.f32 %v713, 1.0
      %v734 = vadd.f32 %v715, 1.0
      %v735 = vadd.f32 %v717, 1.0
      %v736 = vadd.f32 %v719, 1.0
      %v737 = vadd.f32 %v721, 1.0
      %v738 = vrcp.pop %v722
      %v739 = vrcp.pop %v723
      %v740 = vrcp.pop %v724
      %v741 = vrcp.pop %v725
      %v742 = vrcp.pop %v726
      %v743 = vrcp.pop %v727
      %v744 = vrcp.pop %v728
      %v745 = vrcp.pop %v729
      %v746 = vrcp.pop %v730
      %v747 = vrcp.pop %v731
      %v748 = vrcp.pop %v732
      %v749 = vrcp.pop %v733
      %v750 = vrcp.pop %v734
      %v751 = vrcp.pop %v735
      %v752 = vrcp.pop %v736
      %v753 = vrcp.pop %v737
      %v754 = vpack.c.bf16 %v740, %v738
      %v755 = vpack.c.bf16 %v741, %v739
      %v756 = vpack.c.bf16 %v744, %v742
      %v757 = vpack.c.bf16 %v745, %v743
      %v758 = vpack.c.bf16 %v748, %v746
      %v759 = vpack.c.bf16 %v749, %v747
      %v760 = vpack.c.bf16 %v752, %v750
      %v761 = vpack.c.bf16 %v753, %v751
      %v762 = vld [vmem:[%s3] sm:$0xf]
      %v763 = vld [vmem:[%s3 + $0x4] sm:$0xf]
      %v764 = vld [vmem:[%s3 + $0x8] sm:$0xf]
      %v765 = vld [vmem:[%s3 + $0xc] sm:$0xf]
      %v766 = vld [vmem:[%s3 + $0x10] sm:$0xf]
      %v767 = vld [vmem:[%s3 + $0x14] sm:$0xf]
      %v768 = vld [vmem:[%s3 + $0x18] sm:$0xf]
      %v769 = vld [vmem:[%s3 + $0x1c] sm:$0xf]
      %v770 = vld [vmem:[%s3 + $0x20] sm:$0xf]
      %v771 = vld [vmem:[%s3 + $0x24] sm:$0xf]
      %v772 = vld [vmem:[%s3 + $0x28] sm:$0xf]
      %v773 = vld [vmem:[%s3 + $0x2c] sm:$0xf]
      %v774 = vld [vmem:[%s3 + $0x30] sm:$0xf]
      %v775 = vld [vmem:[%s3 + $0x34] sm:$0xf]
      %v776 = vld [vmem:[%s3 + $0x38] sm:$0xf]
      %v777 = vld [vmem:[%s3 + $0x3c] sm:$0xf]
      %v778 = vld [vmem:[%s3 + $0x40] sm:$0xf]
      %v779 = vld [vmem:[%s3 + $0x44] sm:$0xf]
      %v780 = vld [vmem:[%s3 + $0x48] sm:$0xf]
      %v781 = vld [vmem:[%s3 + $0x4c] sm:$0xf]
      %v782 = vld [vmem:[%s3 + $0x50] sm:$0xf]
      %v783 = vld [vmem:[%s3 + $0x54] sm:$0xf]
      %v784 = vld [vmem:[%s3 + $0x58] sm:$0xf]
      %v785 = vld [vmem:[%s3 + $0x5c] sm:$0xf]
      %v786 = vld [vmem:[%s3 + $0x60] sm:$0xf]
      %v787 = vld [vmem:[%s3 + $0x64] sm:$0xf]
      %v788 = vld [vmem:[%s3 + $0x68] sm:$0xf]
      %v789 = vld [vmem:[%s3 + $0x6c] sm:$0xf]
      %v790 = vld [vmem:[%s3 + $0x70] sm:$0xf]
      %v791 = vld [vmem:[%s3 + $0x74] sm:$0xf]
      %v792 = vld [vmem:[%s3 + $0x78] sm:$0xf]
      %v793 = vld [vmem:[%s3 + $0x7c] sm:$0xf]
      %v826 = vunpack.c.l.b16 %v762
      %v827 = vunpack.c.l.b16 %v763
      %v828 = vunpack.c.l.b16 %v764
      %v829 = vunpack.c.l.b16 %v765
      %v830 = vunpack.c.l.b16 %v766
      %v831 = vunpack.c.l.b16 %v767
      %v832 = vunpack.c.l.b16 %v768
      %v833 = vunpack.c.l.b16 %v769
      %v834 = vunpack.c.l.b16 %v770
      %v835 = vunpack.c.l.b16 %v771
      %v836 = vunpack.c.l.b16 %v772
      %v837 = vunpack.c.l.b16 %v773
      %v838 = vunpack.c.l.b16 %v774
      %v839 = vunpack.c.l.b16 %v775
      %v840 = vunpack.c.l.b16 %v776
      %v841 = vunpack.c.l.b16 %v777
      %v842 = vunpack.c.l.b16 %v778
      %v843 = vunpack.c.l.b16 %v779
      %v844 = vunpack.c.l.b16 %v780
      %v845 = vunpack.c.l.b16 %v781
      %v846 = vunpack.c.l.b16 %v782
      %v847 = vunpack.c.l.b16 %v783
      %v848 = vunpack.c.l.b16 %v784
      %v849 = vunpack.c.l.b16 %v785
      %v850 = vunpack.c.l.b16 %v786
      %v851 = vunpack.c.l.b16 %v787
      %v852 = vunpack.c.l.b16 %v788
      %v853 = vunpack.c.l.b16 %v789
      %v854 = vunpack.c.l.b16 %v790
      %v855 = vunpack.c.l.b16 %v791
      %v856 = vunpack.c.l.b16 %v792
      %v857 = vunpack.c.l.b16 %v793
      %v858 = vpack.c.b16 %v827, %v826
      %v859 = vpack.c.b16 %v829, %v828
      %v860 = vpack.c.b16 %v831, %v830
      %v861 = vpack.c.b16 %v833, %v832
      %v862 = vpack.c.b16 %v835, %v834
      %v863 = vpack.c.b16 %v837, %v836
      %v864 = vpack.c.b16 %v839, %v838
      %v865 = vpack.c.b16 %v841, %v840
      %v866 = vpack.c.b16 %v843, %v842
      %v867 = vpack.c.b16 %v845, %v844
      %v868 = vpack.c.b16 %v847, %v846
      %v869 = vpack.c.b16 %v849, %v848
      %v870 = vpack.c.b16 %v851, %v850
      %v871 = vpack.c.b16 %v853, %v852
      %v872 = vpack.c.b16 %v855, %v854
      %v873 = vpack.c.b16 %v857, %v856
      %890 = vmatprep.subr.bf16.mxu0 0
      %891 = vmatpush1.bf16.msra.mxu0 %v865
      %892 = vmatprep.subr.bf16.mxu0 0
      %893 = vmatpush1.bf16.msra.mxu0 %v864
      %894 = vmatprep.subr.bf16.mxu0 0
      %895 = vmatpush1.bf16.msra.mxu0 %v863
      %896 = vmatprep.subr.bf16.mxu0 0
      %897 = vmatpush1.bf16.msra.mxu0 %v862
      %898 = vmatprep.subr.bf16.mxu0 0
      %899 = vmatpush1.bf16.msra.mxu0 %v861
      %900 = vmatprep.subr.bf16.mxu0 0
      %901 = vmatpush1.bf16.msra.mxu0 %v860
      %902 = vmatprep.subr.bf16.mxu0 0
      %903 = vmatpush1.bf16.msra.mxu0 %v859
      %904 = vmatprep.subr.bf16.mxu0 0
      %905 = vmatpush1.bf16.msra.mxu0 %v858
      %906 = vmatprep.subr.bf16.mxu0 0
      %907 = vmatpush2.bf16.msra.mxu0 %v873
      %908 = vmatprep.subr.bf16.mxu0 0
      %909 = vmatpush2.bf16.msra.mxu0 %v872
      %910 = vmatprep.subr.bf16.mxu0 0
      %911 = vmatpush2.bf16.msra.mxu0 %v871
      %912 = vmatprep.subr.bf16.mxu0 0
      %913 = vmatpush2.bf16.msra.mxu0 %v870
      %914 = vmatprep.subr.bf16.mxu0 0
      %915 = vmatpush2.bf16.msra.mxu0 %v869
      %916 = vmatprep.subr.bf16.mxu0 0
      %917 = vmatpush2.bf16.msra.mxu0 %v868
      %918 = vmatprep.subr.bf16.mxu0 0
      %919 = vmatpush2.bf16.msra.mxu0 %v867
      %920 = vmatprep.subr.bf16.mxu0 0
      %921 = vmatpush2.bf16.msra.mxu0 %v866
      %922 = vmatprep.mubr.bf16.mxu0 %v755
      %923 = vmatmul.mubr.bf16.gmra.mxu0 %v754
      %v924 = vpop.f32.mrf.mxu0
      %v925 = vadd.f32 0.0, %v924
      %v926 = vpop.f32.mrf.mxu0
      %v927 = vpop.f32.mrf.mxu0
      %v928 = vadd.f32 0.0, %v927
      %v929 = vpop.f32.mrf.mxu0
      %930 = vmatprep.mubr.bf16.mxu0 %v757
      %931 = vmatmul.mubr.bf16.gmra.mxu0 %v756
      %v932 = vpop.f32.mrf.mxu0
      %v933 = vadd.f32 0.0, %v932
      %v934 = vpop.f32.mrf.mxu0
      %v935 = vpop.f32.mrf.mxu0
      %v936 = vadd.f32 0.0, %v935
      %v937 = vpop.f32.mrf.mxu0
      %938 = vmatprep.mubr.bf16.mxu0 %v759
      %939 = vmatmul.mubr.bf16.gmra.mxu0 %v758
      %v940 = vpop.f32.mrf.mxu0
      %v941 = vadd.f32 0.0, %v940
      %v942 = vpop.f32.mrf.mxu0
      %v943 = vpop.f32.mrf.mxu0
      %v944 = vadd.f32 0.0, %v943
      %v945 = vpop.f32.mrf.mxu0
      %946 = vmatprep.mubr.bf16.mxu0 %v761
      %947 = vmatmul.mubr.bf16.gmra.mxu0 %v760
      %v948 = vpop.f32.mrf.mxu0
      %v949 = vadd.f32 0.0, %v948
      %v950 = vpop.f32.mrf.mxu0
      %v951 = vpop.f32.mrf.mxu0
      %v952 = vadd.f32 0.0, %v951
      %v953 = vpop.f32.mrf.mxu0
      %954 = vdwg.mxu0
      %v955 = vld [vmem:[#allocation2] sm:$0x1]
      %v957 = vlaneseq
      %v958 = vshrl.u32 %v957, 7
      %v959 = vsub.s32 0, %v958
      %v960 = vrot.slane %v955, %v959
      %v962 = vadd.f32 %v925, %v960
      %v963 = vadd.f32 %v928, %v960
      %v964 = vadd.f32 %v933, %v960
      %v965 = vadd.f32 %v936, %v960
      %v966 = vadd.f32 %v941, %v960
      %v967 = vadd.f32 %v944, %v960
      %v968 = vadd.f32 %v949, %v960
      %v969 = vadd.f32 %v952, %v960
      %vm970 = vcmask 7168
      %971 = vst.msk [vmem:[%s231] sm:$0xff] %vm970, %v962
      %972 = vst.msk [vmem:[%s231 + $0x8] sm:$0xff] %vm970, %v963
      %973 = vst.msk [vmem:[%s231 + $0x10] sm:$0xff] %vm970, %v964
      %974 = vst.msk [vmem:[%s231 + $0x18] sm:$0xff] %vm970, %v965
      %975 = vst.msk [vmem:[%s231 + $0x20] sm:$0xff] %vm970, %v966
      %976 = vst.msk [vmem:[%s231 + $0x28] sm:$0xff] %vm970, %v967
      %977 = vst.msk [vmem:[%s231 + $0x30] sm:$0xff] %vm970, %v968
      %978 = vst.msk [vmem:[%s231 + $0x38] sm:$0xff] %vm970, %v969
      %s979 = smul.u32 8, %s18
      %p980 = scmp.lt.s32.totalorder %s979, 15
      %s981 = scalar_select %p980, %s979, 15
      %s982 = smul.addr %s981, 8
      %s983 = scalar_lea.vmem %s5, %s982
      // Predicated region
      $region41: #{tpu_custom_call.1} parent=39 // pred_check
        %p984 = pneg %p146
      $region42: #{tpu_custom_call.1} parent=39 // pred_check_branch
        %986 = sbr.rel (%p984) target = $region44
      $region43: #{tpu_custom_call.1} parent=39 // pred_region
        %s987 = smul.u32 8, %s18
      $region44: #{tpu_custom_call.1} parent=39 // pred_fallthru
        _
    $region40: #{tpu_custom_call.1} parent=5 // pred_fallthru
      _
    %p988 = scmp.le.s32.totalorder 2, %s13
    // Predicated region
    $region45: #{tpu_custom_call.1} parent=5 // pred_check
      %p989 = pneg %p988
    $region46: #{tpu_custom_call.1} parent=5 // pred_check_branch
      %991 = sbr.rel (%p989) target = $region48
    $region47: #{tpu_custom_call.1} parent=5 // pred_region
      %s992 = ssub.s32 %s13, 2
      // Predicated region
      $region49: #{tpu_custom_call.1} parent=47 // pred_check
        %p993 = pneg %p152
      $region50: #{tpu_custom_call.1} parent=47 // pred_check_branch
        %995 = sbr.rel (%p993) target = $region52
      $region51: #{tpu_custom_call.1} parent=47 // pred_region
        %s996 = smul.u32 8, %s19
        %p997 = scmp.lt.s32.totalorder %s996, 15
        %s998 = scalar_select %p997, %s996, 15
        %s999 = smul.addr %s998, 8
        %s1000 = scalar_lea.vmem %s5, %s999
      $region52: #{tpu_custom_call.1} parent=47 // pred_fallthru
        _
    $region48: #{tpu_custom_call.1} parent=5 // pred_fallthru
      _
  $region6: #{tpu_custom_call.1} parent=0 // loop_footer
    %s17 = sadd.s32 1, %s13
  $region7: #{tpu_custom_call.1} parent=0 // loop_footer_branch
    %12 = sbr.rel target = $region3
  $region8: #{tpu_custom_call.1} parent=0 // loop_exit
    _

</llo_original>
